<compile_context>
chip_gen: v7x
topology: tpu7x:2x2x1
jax: 0.10.0
libtpu: 0.0.40
codegen_flags: <defaults>
</compile_context>

<pallas_src>
import functools

import jax
import jax.numpy as jnp
from jax.experimental import pallas as pl
from jax.experimental.pallas import tpu as pltpu

EPS = 1e-5


# ---------------------------------------------------------------------------
# Hardware-derived budgets
# ---------------------------------------------------------------------------
def _vmem_capacity_bytes():
    """Physical VMEM per TensorCore (v5e/v6e: 128 MiB, v7x: 64 MiB)."""
    try:
        cap = getattr(pltpu.get_tpu_info(), "vmem_capacity_bytes", None)
        if cap:
            return int(cap)
    except Exception:
        pass
    return 64 * 1024 * 1024  # conservative default: v7x per-core VMEM


# ---------------------------------------------------------------------------
# Tile-size helpers
# ---------------------------------------------------------------------------
def _divisor_multiples(total, base):
    """Multiples of `base` that divide `total`, descending."""
    out = []
    t = (total // base) * base
    while t >= base:
        if total % t == 0:
            out.append(t)
        t -= base
    return out


def _largest_divisor_leq(total, cap, base=1):
    """Largest divisor of `total` that is a multiple of `base` and <= cap."""
    best = None
    t = base
    hi = min(cap, total)
    while t <= hi:
        if total % t == 0:
            best = t
        t += base
    return best


def _pick_channel_tile(C, sub, fits, prefer_tiles):
    """Largest channel tile (multiple of `sub` dividing C, else full C) that
    passes `fits`, preferring >= `prefer_tiles` blocks along the parallel
    channel axis (keeps both v7x TensorCores busy)."""
    cands = _divisor_multiples(C, sub) or [C]
    preferred = [t for t in cands if C // t >= prefer_tiles]
    others = [t for t in cands if C // t < prefer_tiles]
    for t in preferred + others:
        if fits(t):
            return t
    return None


# ---------------------------------------------------------------------------
# Fused single-pass kernel: stats + normalize + ReLU on a VMEM-resident slab.
# grid = (C_tiles,);  x block = (N, tc, HW)  ->  1 HBM read + 1 HBM write.
# ---------------------------------------------------------------------------
def _fused_kernel(x_ref, gamma_ref, beta_ref, o_ref, sum_sc, sq_sc, *,
                  inv_m, n_batch):
    # Per-batch loop keeps f32 temporaries at (tc, HW) instead of (N, tc, HW).
    sum_sc[...] = jnp.zeros_like(sum_sc)
    sq_sc[...] = jnp.zeros_like(sq_sc)

    @pl.loop(0, n_batch)
    def _(i):
        xi = x_ref[i].astype(jnp.float32)            # (tc, HW)
        sum_sc[...] += xi                            # VPU adds only
        sq_sc[...] += xi * xi

    # Single cross-lane (XLU) reduction on the already batch-reduced slab.
    s = jnp.sum(sum_sc[...], axis=1, keepdims=True)      # (tc, 1)
    sq = jnp.sum(sq_sc[...], axis=1, keepdims=True)      # (tc, 1)
    mean = s * inv_m
    # Biased variance via E[x^2] - mean^2 in f32 (fine for activation-scale data).
    var = jnp.maximum(sq * inv_m - mean * mean, 0.0)
    inv_std = jax.lax.rsqrt(var + EPS)
    scale = gamma_ref[...] * inv_std                     # (tc, 1)
    shift = beta_ref[...] - mean * scale                 # (tc, 1)

    @pl.loop(0, n_batch)
    def _(i):
        xi = x_ref[i].astype(jnp.float32)
        o_ref[i] = jnp.maximum(xi * scale + shift, 0.0).astype(o_ref.dtype)


# ---------------------------------------------------------------------------
# Fallback pass 1: per-channel statistics -> fused affine (scale, shift).
# grid = (C_tiles, N_blocks, HW_blocks); axes 1 & 2 are the reduction axes.
# ---------------------------------------------------------------------------
def _stats_kernel(x_ref, gamma_ref, beta_ref, scale_ref, shift_ref,
                  sum_acc, sq_acc, *, inv_m):
    n = pl.program_id(1)
    h = pl.program_id(2)

    @pl.when((n == 0) & (h == 0))
    def _():
        sum_acc[...] = jnp.zeros_like(sum_acc)
        sq_acc[...] = jnp.zeros_like(sq_acc)

    x = x_ref[...].astype(jnp.float32)               # (Nb, tc, thw)
    # Batch reduction (VPU), then lane-parallel accumulation into the (tc, thw)
    # scratch: no per-grid-step cross-lane (XLU) reduction.
    sum_acc[...] += jnp.sum(x, axis=0)
    sq_acc[...] += jnp.sum(x * x, axis=0)

    @pl.when((n == pl.num_programs(1) - 1) & (h == pl.num_programs(2) - 1))
    def _():
        s = jnp.sum(sum_acc[...], axis=1, keepdims=True)   # single XLU reduce
        sq = jnp.sum(sq_acc[...], axis=1, keepdims=True)
        mean = s * inv_m
        var = jnp.maximum(sq * inv_m - mean * mean, 0.0)    # biased variance
        inv_std = jax.lax.rsqrt(var + EPS)
        scale = gamma_ref[...] * inv_std
        scale_ref[...] = scale
        shift_ref[...] = beta_ref[...] - mean * scale


# ---------------------------------------------------------------------------
# Fallback pass 2: y = relu(x * scale + shift), fully parallel grid.
# ---------------------------------------------------------------------------
def _apply_kernel(x_ref, scale_ref, shift_ref, o_ref):
    x = x_ref[...].astype(jnp.float32)               # (Nb, tc, thw)
    y = x * scale_ref[...][None] + shift_ref[...][None]
    o_ref[...] = jnp.maximum(y, 0.0).astype(o_ref.dtype)


# ---------------------------------------------------------------------------
# Wrapper
# ---------------------------------------------------------------------------
def batchnorm_relu(x_nchw, gamma, beta, *, donate_input=False,
                   force_two_pass=False):
    """Training-mode nn.BatchNorm2d(eps=1e-5, affine=True) forward + ReLU."""
    N, C, H, W = x_nchw.shape
    HW = H * W
    M = N * HW
    inv_m = 1.0 / float(M)
    dtype = x_nchw.dtype
    item = jnp.dtype(dtype).itemsize
    sub = 16 if item < 4 else 8            # sublane packing for the channel axis

    # Free layout change (pure reshape, no transpose): NCHW -> (N, C, H*W).
    x3 = x_nchw.reshape(N, C, HW)
    gamma2 = gamma.reshape(C, 1).astype(jnp.float32)
    beta2 = beta.reshape(C, 1).astype(jnp.float32)

    # Generation-aware VMEM budget (v7x: 64 MiB/core, v5e/v6e: 128 MiB).
    vmem_cap = _vmem_capacity_bytes()
    vmem_limit = int(vmem_cap * 0.75)      # leave 25% headroom for the compiler
    buf_budget = int(vmem_limit * 0.85)    # room for pipelined block buffers

    prefer_tiles = max(1, min(4, C // sub))   # >=2 (ideally 4) parallel blocks

    # -------------------- fused single-pass path ---------------------------
    def _fused_bytes(t):
        slab = N * t * HW * item
        return 4 * slab + 6 * t * HW * 4   # 2x in + 2x out buffers + f32 scratch

    if not force_two_pass:
        tc = _pick_channel_tile(C, sub, lambda t: _fused_bytes(t) <= buf_budget,
                                prefer_tiles)
        if tc is not None:
            grid = (C // tc,)
            x_spec = pl.BlockSpec((N, tc, HW), lambda c: (0, c, 0))
            p_spec = pl.BlockSpec((tc, 1), lambda c: (c, 0))
            out3 = pl.pallas_call(
                functools.partial(_fused_kernel, inv_m=inv_m, n_batch=N),
                out_shape=jax.ShapeDtypeStruct((N, C, HW), dtype),
                grid=grid,
                in_specs=[x_spec, p_spec, p_spec],
                out_specs=x_spec,
                scratch_shapes=[pltpu.VMEM((tc, HW), jnp.float32),
                                pltpu.VMEM((tc, HW), jnp.float32)],
                input_output_aliases={0: 0} if donate_input else {},
                compiler_params=pltpu.CompilerParams(
                    dimension_semantics=("parallel",),
                    vmem_limit_bytes=vmem_limit),
            )(x3, gamma2, beta2)
            return out3.reshape(N, C, H, W)

    # -------------------- fallback: two pipelined passes -------------------
    # ~1-2 MiB blocks reach 85%+ of the HBM roofline (per-step overhead amortized).
    block_budget = min(buf_budget // 8, 2 * 1024 * 1024)

    tc = _pick_channel_tile(C, sub, lambda t: t <= 128, prefer_tiles)
    if tc is None:
        tc = C

    pad_to = None
    if HW % 128 == 0:
        thw_cap = max(128, block_budget // (tc * item))
        thw = _largest_divisor_leq(HW, thw_cap, base=128) or HW
    elif tc * HW * item <= block_budget:
        thw = HW                           # full-extent lane dim (allowed by (8,128) rule)
    else:
        # Large spatial with no 128-multiple divisor: pad HW once to a
        # lane-dense multiple of 128.  Zero pads don't perturb sum / sum-of-
        # squares (we divide by the true M); padded outputs are sliced away.
        pad_to = -(-HW // 128) * 128
        thw_cap = max(128, block_budget // (tc * item))
        thw = _largest_divisor_leq(pad_to, thw_cap, base=128) or 128

    HW_eff = pad_to if pad_to is not None else HW
    x_in = x3 if pad_to is None else jnp.pad(
        x3, ((0, 0), (0, 0), (0, pad_to - HW)))

    nb = _largest_divisor_leq(
        N, max(1, block_budget // (tc * thw * item)), base=1) or 1

    grid = (C // tc, N // nb, HW_eff // thw)
    x_spec = pl.BlockSpec((nb, tc, thw), lambda c, n, h: (n, c, h))
    p_spec = pl.BlockSpec((tc, 1), lambda c, n, h: (c, 0))

    # Pass 1: per-channel statistics -> fused (scale, shift).
    scale, shift = pl.pallas_call(
        functools.partial(_stats_kernel, inv_m=inv_m),
        out_shape=(jax.ShapeDtypeStruct((C, 1), jnp.float32),
                   jax.ShapeDtypeStruct((C, 1), jnp.float32)),
        grid=grid,
        in_specs=[x_spec, p_spec, p_spec],
        out_specs=(p_spec, p_spec),
        scratch_shapes=[pltpu.VMEM((tc, thw), jnp.float32),
                        pltpu.VMEM((tc, thw), jnp.float32)],
        compiler_params=pltpu.CompilerParams(
            dimension_semantics=("parallel", "arbitrary", "arbitrary"),
            vmem_limit_bytes=vmem_limit),
    )(x_in, gamma2, beta2)

    # Pass 2: elementwise normalize + ReLU, fully parallel grid.
    out3 = pl.pallas_call(
        _apply_kernel,
        out_shape=jax.ShapeDtypeStruct((N, C, HW_eff), dtype),
        grid=grid,
        in_specs=[x_spec, p_spec, p_spec],
        out_specs=x_spec,
        input_output_aliases={0: 0} if donate_input else {},
        compiler_params=pltpu.CompilerParams(
            dimension_semantics=("parallel", "parallel", "parallel"),
            vmem_limit_bytes=vmem_limit),
    )(x_in, scale, shift)

    if pad_to is not None:
        out3 = out3[:, :, :HW]
    return out3.reshape(N, C, H, W)
    # TODO(synk): running_mean / running_var momentum updates (stateful
    # nn.BatchNorm2d buffers) are omitted; they don't affect the forward output.


def _reference(x_nchw, gamma, beta):
    x = x_nchw.astype(jnp.float32)
    mean = jnp.mean(x, axis=(0, 2, 3), keepdims=True)
    var = jnp.mean((x - mean) ** 2, axis=(0, 2, 3), keepdims=True)
    y = (x - mean) * jax.lax.rsqrt(var + EPS)
    y = y * gamma.reshape(1, -1, 1, 1) + beta.reshape(1, -1, 1, 1)
    return jnp.maximum(y, 0.0).astype(x_nchw.dtype)


if __name__ == "__main__":
    key = jax.random.PRNGKey(0)
    kx, kg, kb = jax.random.split(key, 3)

    def _check(shape, **kw):
        n, c, hgt, wid = shape
        x = jax.random.normal(kx, shape, dtype=jnp.float32)
        gamma = 1.0 + 0.1 * jax.random.normal(kg, (c,), dtype=jnp.float32)
        beta = 0.1 * jax.random.normal(kb, (c,), dtype=jnp.float32)
        out = jax.block_until_ready(batchnorm_relu(x, gamma, beta, **kw))
        ref = _reference(x, gamma, beta)
        assert out.shape == shape
        assert jnp.allclose(out, ref, atol=1e-4, rtol=1e-4), f"mismatch at {shape}"

    _check((2, 4, 16, 16))                           # module example: fused path
    _check((2, 16, 32, 32))                          # fused path, 2 parallel channel tiles
    _check((2, 16, 8, 16), force_two_pass=True)      # fallback, 128-multiple lanes
    _check((2, 16, 14, 14), force_two_pass=True)     # fallback, full-extent lane dim
    print("KERNEL_OK")
</pallas_src>

<mosaic_0001>
module attributes {stable_mosaic.version = 11 : i64} {
  func.func @_fused_kernel(%arg0: i32, %arg1: memref<2x4x256xf32, #tpu.memory_space<vmem>>, %arg2: memref<4x1xf32, #tpu.memory_space<vmem>>, %arg3: memref<4x1xf32, #tpu.memory_space<vmem>>, %arg4: memref<2x4x256xf32, #tpu.memory_space<vmem>>, %arg5: memref<4x256xf32, #tpu.memory_space<vmem>>, %arg6: memref<4x256xf32, #tpu.memory_space<vmem>>) attributes {dimension_semantics = [#tpu.dimension_semantics<parallel>], iteration_bounds = array<i64: 1>, scalar_prefetch = 0 : i64, scratch_operands = 2 : i64, tpu.core_type = #tpu.core_type<tc>, window_params = [{transform_indices = @transform_0, window_bounds = array<i64: 2, 4, 256>}, {transform_indices = @transform_1, window_bounds = array<i64: 4, 1>}, {transform_indices = @transform_2, window_bounds = array<i64: 4, 1>}, {transform_indices = @transform_3, window_bounds = array<i64: 2, 4, 256>}]} {
    %cst = arith.constant 0.000000e+00 : f32
    %0 = vector.broadcast %cst : f32 to vector<4x256xf32>
    %c0 = arith.constant 0 : index
    %c0_0 = arith.constant 0 : index
    %1 = vector.load %arg5[%c0, %c0_0] : memref<4x256xf32, #tpu.memory_space<vmem>>, vector<4x256xf32>
    tpu.vector_store %arg5[%c0, %c0_0], %0 {strides = array<i32>} : memref<4x256xf32, #tpu.memory_space<vmem>>, vector<4x256xf32>,
    %cst_1 = arith.constant 0.000000e+00 : f32
    %2 = vector.broadcast %cst_1 : f32 to vector<4x256xf32>
    %c0_2 = arith.constant 0 : index
    %c0_3 = arith.constant 0 : index
    %3 = vector.load %arg6[%c0_2, %c0_3] : memref<4x256xf32, #tpu.memory_space<vmem>>, vector<4x256xf32>
    tpu.vector_store %arg6[%c0_2, %c0_3], %2 {strides = array<i32>} : memref<4x256xf32, #tpu.memory_space<vmem>>, vector<4x256xf32>,
    %c0_i32 = arith.constant 0 : i32
    %c2_i32 = arith.constant 2 : i32
    %4 = arith.addi %c0_i32, %c2_i32 : i32
    %c1_i32 = arith.constant 1 : i32
    scf.for %arg7 = %c0_i32 to %4 step %c1_i32  : i32 {
      %c1_i32_23 = arith.constant 1 : i32
      %28 = arith.muli %arg7, %c1_i32_23 : i32
      %c0_i32_24 = arith.constant 0 : i32
      %29 = arith.addi %c0_i32_24, %28 : i32
      %30 = arith.index_cast %29 : i32 to index
      %c0_25 = arith.constant 0 : index
      %c0_26 = arith.constant 0 : index
      %31 = vector.load %arg1[%30, %c0_25, %c0_26] : memref<2x4x256xf32, #tpu.memory_space<vmem>>, vector<1x4x256xf32>
      %32 = vector.shape_cast %31 : vector<1x4x256xf32> to vector<4x256xf32>
      %c0_27 = arith.constant 0 : index
      %c0_28 = arith.constant 0 : index
      %33 = vector.load %arg5[%c0_27, %c0_28] : memref<4x256xf32, #tpu.memory_space<vmem>>, vector<4x256xf32>
      %34 = arith.addf %33, %32 : vector<4x256xf32>
      %c0_29 = arith.constant 0 : index
      %c0_30 = arith.constant 0 : index
      %35 = vector.load %arg5[%c0_29, %c0_30] : memref<4x256xf32, #tpu.memory_space<vmem>>, vector<4x256xf32>
      tpu.vector_store %arg5[%c0_29, %c0_30], %34 {strides = array<i32>} : memref<4x256xf32, #tpu.memory_space<vmem>>, vector<4x256xf32>,
      %c0_31 = arith.constant 0 : index
      %c0_32 = arith.constant 0 : index
      %36 = vector.load %arg6[%c0_31, %c0_32] : memref<4x256xf32, #tpu.memory_space<vmem>>, vector<4x256xf32>
      %37 = arith.mulf %32, %32 : vector<4x256xf32>
      %38 = arith.addf %36, %37 : vector<4x256xf32>
      %c0_33 = arith.constant 0 : index
      %c0_34 = arith.constant 0 : index
      %39 = vector.load %arg6[%c0_33, %c0_34] : memref<4x256xf32, #tpu.memory_space<vmem>>, vector<4x256xf32>
      tpu.vector_store %arg6[%c0_33, %c0_34], %38 {strides = array<i32>} : memref<4x256xf32, #tpu.memory_space<vmem>>, vector<4x256xf32>,
    }
    %c2_i32_4 = arith.constant 2 : i32
    %c0_5 = arith.constant 0 : index
    %c0_6 = arith.constant 0 : index
    %5 = vector.load %arg5[%c0_5, %c0_6] : memref<4x256xf32, #tpu.memory_space<vmem>>, vector<4x256xf32>
    %cst_7 = arith.constant dense<0.000000e+00> : vector<4xf32>
    %6 = vector.multi_reduction <add>, %5, %cst_7 [1] : vector<4x256xf32> to vector<4xf32>
    %7 = vector.shape_cast %6 : vector<4xf32> to vector<4x1xf32>
    %c0_8 = arith.constant 0 : index
    %c0_9 = arith.constant 0 : index
    %8 = vector.load %arg6[%c0_8, %c0_9] : memref<4x256xf32, #tpu.memory_space<vmem>>, vector<4x256xf32>
    %cst_10 = arith.constant dense<0.000000e+00> : vector<4xf32>
    %9 = vector.multi_reduction <add>, %8, %cst_10 [1] : vector<4x256xf32> to vector<4xf32>
    %10 = vector.shape_cast %9 : vector<4xf32> to vector<4x1xf32>
    %cst_11 = arith.constant 0.001953125 : f32
    %11 = vector.broadcast %cst_11 : f32 to vector<4x1xf32>
    %12 = arith.mulf %7, %11 : vector<4x1xf32>
    %cst_12 = arith.constant 0.001953125 : f32
    %13 = vector.broadcast %cst_12 : f32 to vector<4x1xf32>
    %14 = arith.mulf %10, %13 : vector<4x1xf32>
    %15 = arith.mulf %12, %12 : vector<4x1xf32>
    %16 = arith.subf %14, %15 : vector<4x1xf32>
    %cst_13 = arith.constant 0.000000e+00 : f32
    %17 = vector.broadcast %cst_13 : f32 to vector<4x1xf32>
    %18 = arith.maximumf %16, %17 : vector<4x1xf32>
    %cst_14 = arith.constant 9.99999974E-6 : f32
    %19 = vector.broadcast %cst_14 : f32 to vector<4x1xf32>
    %20 = arith.addf %18, %19 : vector<4x1xf32>
    %21 = math.rsqrt %20 : vector<4x1xf32>
    %c0_15 = arith.constant 0 : index
    %c0_16 = arith.constant 0 : index
    %22 = vector.load %arg2[%c0_15, %c0_16] : memref<4x1xf32, #tpu.memory_space<vmem>>, vector<4x1xf32>
    %23 = arith.mulf %22, %21 : vector<4x1xf32>
    %c0_17 = arith.constant 0 : index
    %c0_18 = arith.constant 0 : index
    %24 = vector.load %arg3[%c0_17, %c0_18] : memref<4x1xf32, #tpu.memory_space<vmem>>, vector<4x1xf32>
    %25 = arith.mulf %12, %23 : vector<4x1xf32>
    %26 = arith.subf %24, %25 : vector<4x1xf32>
    %c0_i32_19 = arith.constant 0 : i32
    %c2_i32_20 = arith.constant 2 : i32
    %27 = arith.addi %c0_i32_19, %c2_i32_20 : i32
    %c1_i32_21 = arith.constant 1 : i32
    scf.for %arg7 = %c0_i32_19 to %27 step %c1_i32_21  : i32 {
      %c1_i32_23 = arith.constant 1 : i32
      %28 = arith.muli %arg7, %c1_i32_23 : i32
      %c0_i32_24 = arith.constant 0 : i32
      %29 = arith.addi %c0_i32_24, %28 : i32
      %30 = arith.index_cast %29 : i32 to index
      %c0_25 = arith.constant 0 : index
      %c0_26 = arith.constant 0 : index
      %31 = vector.load %arg1[%30, %c0_25, %c0_26] : memref<2x4x256xf32, #tpu.memory_space<vmem>>, vector<1x4x256xf32>
      %32 = vector.shape_cast %31 : vector<1x4x256xf32> to vector<4x256xf32>
      %33 = vector.broadcast %23 : vector<4x1xf32> to vector<4x256xf32>
      %34 = arith.mulf %32, %33 : vector<4x256xf32>
      %35 = vector.broadcast %26 : vector<4x1xf32> to vector<4x256xf32>
      %36 = arith.addf %34, %35 : vector<4x256xf32>
      %cst_27 = arith.constant 0.000000e+00 : f32
      %37 = vector.broadcast %cst_27 : f32 to vector<4x256xf32>
      %38 = arith.maximumf %36, %37 : vector<4x256xf32>
      %39 = arith.index_cast %29 : i32 to index
      %c0_28 = arith.constant 0 : index
      %c0_29 = arith.constant 0 : index
      %40 = vector.load %arg4[%39, %c0_28, %c0_29] : memref<2x4x256xf32, #tpu.memory_space<vmem>>, vector<1x4x256xf32>
      %41 = vector.shape_cast %40 : vector<1x4x256xf32> to vector<4x256xf32>
      %42 = vector.shape_cast %38 : vector<4x256xf32> to vector<1x4x256xf32>
      tpu.vector_store %arg4[%39, %c0_28, %c0_29], %42 {strides = array<i32>} : memref<2x4x256xf32, #tpu.memory_space<vmem>>, vector<1x4x256xf32>,
    }
    %c2_i32_22 = arith.constant 2 : i32
    return
  }
  func.func @transform_0(%arg0: i32) -> (i32, i32, i32) {
    %c0_i32 = arith.constant 0 : i32
    %c0_i32_0 = arith.constant 0 : i32
    %c0_i32_1 = arith.constant 0 : i32
    return %c0_i32, %arg0, %c0_i32_0 : i32, i32, i32
  }
  func.func @transform_1(%arg0: i32) -> (i32, i32) {
    %c0_i32 = arith.constant 0 : i32
    %c0_i32_0 = arith.constant 0 : i32
    return %arg0, %c0_i32 : i32, i32
  }
  func.func @transform_2(%arg0: i32) -> (i32, i32) {
    %c0_i32 = arith.constant 0 : i32
    %c0_i32_0 = arith.constant 0 : i32
    return %arg0, %c0_i32 : i32, i32
  }
  func.func @transform_3(%arg0: i32) -> (i32, i32, i32) {
    %c0_i32 = arith.constant 0 : i32
    %c0_i32_0 = arith.constant 0 : i32
    %c0_i32_1 = arith.constant 0 : i32
    return %c0_i32, %arg0, %c0_i32_0 : i32, i32, i32
  }
}

</mosaic_0001>

<llo_original>
// kernel: tpu_custom_call.1
$region0: #{tpu_custom_call.1}
  #allocation0 [shape = 'u32[]', space=smem, size = 0x4, offset = 0x4, fixed_abs, tag = 'smem constant byte address 0x4 - core index']
  #allocation1 [shape = 'u32[144,128]{1,0:T(1,128)}', space=vmem, size = 0x12000, scoped, tag = 'internal scratch']
  #allocation2 [shape = 'f32[4,256]{1,0:T(4,128)}', space=vmem, size = 0x1000, scoped, tag = 'scratch operand']
  #allocation3 [shape = 'f32[4,256]{1,0:T(4,128)}', space=vmem, size = 0x1000, scoped, tag = 'scratch operand']
  %s0 = inlined_call_operand.hbm [shape: f32[2,4,256], index: 0, kind: input, shape index: {}]
  %s1 = inlined_call_operand.vmem [shape: f32[4,1], index: 1, kind: input, shape index: {}]
  %s2 = inlined_call_operand.vmem [shape: f32[4,1], index: 2, kind: input, shape index: {}]
  %s3 = inlined_call_operand.hbm [shape: f32[2,4,256], index: 3, kind: output, shape index: {}]
  %s4 = sld [smem:[#allocation0]]
  $region40: #{tpu_custom_call.1} parent=0
    _
  %s6 = ssub.s32 1, %s4
  %s7 = scalar_select 0, %s6, %s4
  $region1: #{tpu_custom_call.1} parent=0
    #allocation4 [shape = 'u8[8192]{0}', space=vmem, size = 0x2000, scoped, tag = 'input window, operand 0, single buffered']
    #allocation5 [shape = 's32[1]{0}', space=sflag, size = 0x4, scoped, tag = 'scoped memory for tpu_custom_call.1']
    #allocation6 [shape = 's32[1]{0}', space=sflag, size = 0x4, scoped, tag = 'scoped memory for tpu_custom_call.1']
    #allocation7 [shape = 'u8[8192]{0}', space=vmem, size = 0x2000, scoped, tag = 'output window, operand 0, single buffered']
    %8 = vsyncpa [#allocation5], 0
    %9 = vsyncpa [#allocation6], 0
    // Predicated region
    $region2: #{tpu_custom_call.1} parent=1 // pred_check
      _
    $region3: #{tpu_custom_call.1} parent=1 // pred_check_branch
      %11 = sbr.rel (0) target = $region5
    $region4: #{tpu_custom_call.1} parent=1 // pred_region
      %s13 = ssub.s32 256, 256
      %14 = vsyncadd [#allocation5], %s13
      %s15 = sshll.u32 [#allocation4], 4
      %s16 = int_to_ptr.vmem [resolvable:$true] %s15
      %21 = dma.hbm_to_vmem [thread:$0]  %s0, 256, %s16, [#allocation5], 128, 128, 8
    $region5: #{tpu_custom_call.1} parent=1 // pred_fallthru
      _
    // Predicated region
    $region6: #{tpu_custom_call.1} parent=1 // pred_check
      _
    $region7: #{tpu_custom_call.1} parent=1 // pred_check_branch
      %23 = sbr.rel (0) target = $region9
    $region8: #{tpu_custom_call.1} parent=1 // pred_region
      _
    $region9: #{tpu_custom_call.1} parent=1 // pred_fallthru
      _
    // Predicated region
    $region10: #{tpu_custom_call.1} parent=1 // pred_check
      _
    $region11: #{tpu_custom_call.1} parent=1 // pred_check_branch
      %25 = sbr.rel (0) target = $region13
    $region12: #{tpu_custom_call.1} parent=1 // pred_region
      _
    $region13: #{tpu_custom_call.1} parent=1 // pred_fallthru
      _
    // Predicated region
    $region14: #{tpu_custom_call.1} parent=1 // pred_check
      _
    $region15: #{tpu_custom_call.1} parent=1 // pred_check_branch
      %27 = sbr.rel (0) target = $region17
    $region16: #{tpu_custom_call.1} parent=1 // pred_region
      %28 = dma.done [#allocation5], 256
    $region17: #{tpu_custom_call.1} parent=1 // pred_fallthru
      _
    %29 = vst [vmem:[#allocation2] sm:$0xff] 0.0
    %30 = vst [vmem:[#allocation3] sm:$0xff] 0.0
    loop: start=0, step=1, limit=2
    $region18: #{tpu_custom_call.1} parent=1 // loop_pre_header
      _
    $region19: #{tpu_custom_call.1} parent=1 // loop_header
      %s32 = sphi 0, %s36
      %p33 = scmp.ge.s32.totalorder %s32, 2
    $region20: #{tpu_custom_call.1} parent=1 // loop_header_branch
      %35 = sbr.rel (%p33) target = $region24
    $region21: #{tpu_custom_call.1} parent=1 // loop_body
      %s37 = smul.u32 %s32, 2
      %s38 = smul.addr %s37, 4
      %s39 = scalar_lea.vmem [#allocation4], %s38
      %v40 = vld [vmem:[%s39] sm:$0xff]
      %v41 = vld [vmem:[#allocation2] sm:$0xff]
      %v42 = vadd.f32 %v41, %v40
      %43 = vst [vmem:[#allocation2] sm:$0xff] %v42
      %v44 = vld [vmem:[#allocation3] sm:$0xff]
      %v45 = vmul.f32 %v40, %v40
      %v46 = vadd.f32 %v44, %v45
      %47 = vst [vmem:[#allocation3] sm:$0xff] %v46
    $region22: #{tpu_custom_call.1} parent=1 // loop_footer
      %s36 = sadd.s32 1, %s32
    $region23: #{tpu_custom_call.1} parent=1 // loop_footer_branch
      %31 = sbr.rel target = $region19
    $region24: #{tpu_custom_call.1} parent=1 // loop_exit
      _
    %v48 = vld [vmem:[#allocation2] sm:$0xff]
    %v50 = vcombine.high %v48, %v48
    %vm52 = vcmask 1043456
    %v53 = vsel %vm52, %v48, 0.0
    %v54 = vsel %vm52, %v50, 0.0
    %v55 = vadd.f32 %v53, %v54
    %56 = vadd.xlane.f32.xlu0 %v55
    %v57 = vpop.xlane.xlu0 %56
    %v58 = vld [vmem:[#allocation3] sm:$0xff]
    %v60 = vcombine.high %v58, %v58
    %v62 = vsel %vm52, %v58, 0.0
    %v63 = vsel %vm52, %v60, 0.0
    %v64 = vadd.f32 %v62, %v63
    %65 = vadd.xlane.f32.xlu0 %v64
    %v66 = vpop.xlane.xlu0 %65
    %v67 = vmul.f32 %v57, 0.001953125
    %v68 = vmul.f32 %v66, 0.001953125
    %v69 = vmul.f32 %v67, %v67
    %v70 = vsub.f32 %v68, %v69
    %v71 = vmax.f32 %v70, 0.0
    %v72 = vadd.f32 %v71, 1e-05
    %v73 = vrsqrt.pop %v72
    %v74 = vld [vmem:[%s1] sm:$0xf]
    %v75 = vmul.f32 %v74, %v73
    %v76 = vld [vmem:[%s2] sm:$0xf]
    %v77 = vmul.f32 %v67, %v75
    %v78 = vsub.f32 %v76, %v77
    loop: start=0, step=1, limit=2
    $region25: #{tpu_custom_call.1} parent=1 // loop_pre_header
      _
    $region26: #{tpu_custom_call.1} parent=1 // loop_header
      %s80 = sphi 0, %s84
      %p81 = scmp.ge.s32.totalorder %s80, 2
    $region27: #{tpu_custom_call.1} parent=1 // loop_header_branch
      %83 = sbr.rel (%p81) target = $region31
    $region28: #{tpu_custom_call.1} parent=1 // loop_body
      %s85 = smul.u32 %s80, 2
      %s86 = smul.addr %s85, 4
      %s87 = scalar_lea.vmem [#allocation4], %s86
      %v88 = vld [vmem:[%s87] sm:$0xff]
      %90 = vset.pattern.permute.xlu0 0
      %91 = vperm.xlu0 %90, %v75
      %v92 = vpop.permute.xlu0 %91
      %v94 = vunpack.c.l.s4 839922192
      %v95 = vunpack.c.0.s8 %v94
      %v96 = vlaneseq
      %v97 = vshrl.u32 %v96, 7
      %v98 = vsub.s32 %v95, %v97
      %v99 = vrot.slane %v92, %v98
      %v101 = vmul.f32 %v88, %v99
      %103 = vset.pattern.permute.xlu0 0
      %104 = vperm.xlu0 %103, %v78
      %v105 = vpop.permute.xlu0 %104
      %v107 = vunpack.c.l.s4 839922192
      %v108 = vunpack.c.0.s8 %v107
      %v109 = vlaneseq
      %v110 = vshrl.u32 %v109, 7
      %v111 = vsub.s32 %v108, %v110
      %v112 = vrot.slane %v105, %v111
      %v114 = vadd.f32 %v101, %v112
      %v115 = vmax.f32 %v114, 0.0
      %s116 = smul.addr %s85, 4
      %s117 = scalar_lea.vmem [#allocation7], %s116
      %118 = vst [vmem:[%s117] sm:$0xff] %v115
    $region29: #{tpu_custom_call.1} parent=1 // loop_footer
      %s84 = sadd.s32 1, %s80
    $region30: #{tpu_custom_call.1} parent=1 // loop_footer_branch
      %79 = sbr.rel target = $region26
    $region31: #{tpu_custom_call.1} parent=1 // loop_exit
      _
    // Predicated region
    $region32: #{tpu_custom_call.1} parent=1 // pred_check
      _
    $region33: #{tpu_custom_call.1} parent=1 // pred_check_branch
      %120 = sbr.rel (0) target = $region35
    $region34: #{tpu_custom_call.1} parent=1 // pred_region
      %s122 = ssub.s32 256, 256
      %123 = vsyncadd [#allocation6], %s122
      %s124 = sshll.u32 [#allocation7], 4
      %s125 = int_to_ptr.vmem [resolvable:$true] %s124
      %130 = dma.vmem_to_hbm [thread:$0]  %s125, 256, %s3, [#allocation6], 128, 128, 8
    $region35: #{tpu_custom_call.1} parent=1 // pred_fallthru
      _
    // Predicated region
    $region36: #{tpu_custom_call.1} parent=1 // pred_check
      _
    $region37: #{tpu_custom_call.1} parent=1 // pred_check_branch
      %132 = sbr.rel (0) target = $region39
    $region38: #{tpu_custom_call.1} parent=1 // pred_region
      %133 = dma.done [#allocation6], 256
    $region39: #{tpu_custom_call.1} parent=1 // pred_fallthru
      _
    %134 = vsyncpa [#allocation5], 1
    %135 = vsyncpa [#allocation6], 1

</llo_original>
